<compile_context>
chip_gen: v6e
topology: v6e:2x2x1
jax: 0.10.0
libtpu: 0.0.40
codegen_flags: <defaults>
</compile_context>

<pallas_src>
import jax
import jax.numpy as jnp
from jax import lax
from jax.experimental import pallas as pl
from jax.experimental.pallas import tpu as pltpu


def _round_up(x, m):
    return ((x + m - 1) // m) * m


def rollout_loss_kernel(params_ref, dts_ref, state0_ref, A_ref, gt_ref,
                        preds_ref, losspart_ref, state_ref, acc_ref):
    """One grid step = one (batch-block b, time-block t) tile.

    grid = (NB, NT), dimension_semantics = ("parallel", "arbitrary")

    Inputs
      params_ref  : SMEM (2,)         f32  [stiffness k, damping c]
      dts_ref     : SMEM (T,)         f32  per-timestep dt
      state0_ref  : VMEM (BB, Dp)     f32  initial state block (per b)
      A_ref       : VMEM (Dp, Dp)     f32  dynamics matrix (constant index -> resident)
      gt_ref      : VMEM (TT, BB, Dp) f32  ground-truth tile (time-major)
    Outputs
      preds_ref   : VMEM (TT, BB, Dp) f32  predicted states tile (time-major)
      losspart_ref: VMEM (1, 8, 128)  f32  per-batch-block sum of squared error,
                                           broadcast over a full vreg (lane-dense
                                           unmasked store instead of a (1,1) tile)
    Scratch (persist across grid steps)
      state_ref   : VMEM (BB, Dp) f32  state carried across the time sweep
      acc_ref     : VMEM (BB, Dp) f32  elementwise running squared error
    """
    t_idx = pl.program_id(1)
    n_t = pl.num_programs(1)

    k = params_ref[0]
    c = params_ref[1]
    A = A_ref[...]
    TT = gt_ref.shape[0]

    # --- init state carry / error accumulator at the start of each time sweep
    @pl.when(t_idx == 0)
    def _():
        state_ref[...] = state0_ref[...]
        acc_ref[...] = jnp.zeros_like(acc_ref)

    # --- unrolled rollout over the TT timesteps of this tile ----------------
    def body(i, carry):
        state, acc = carry
        dt = dts_ref[t_idx * TT + i]
        # scalar work hoisted off the vector carry chain:
        #   next = (1 - dt*c) * state + (dt*k) * (state @ A)
        s_keep = 1.0 - dt * c
        s_push = dt * k
        nxt = s_keep * state + s_push * jnp.dot(
            state, A, preferred_element_type=jnp.float32)
        preds_ref[i] = nxt                       # batch_state_preds.append(state)
        diff = nxt - gt_ref[i]
        return nxt, acc + diff * diff            # reduce to scalar only at the end

    state, acc = lax.fori_loop(0, TT, body,
                               (state_ref[...], acc_ref[...]),
                               unroll=True)
    state_ref[...] = state
    acc_ref[...] = acc

    # --- finalize: single cross-lane reduction, lane-dense partial output ---
    @pl.when(t_idx == n_t - 1)
    def _():
        sse = jnp.sum(acc)
        losspart_ref[...] = sse + jnp.zeros(losspart_ref.shape, jnp.float32)


def _pick_time_block(T, BB, Dp, budget_bytes=12 << 20):
    # gt tile + preds tile, each double-buffered by the BlockSpec pipeline:
    #   ~4 * TT * BB * Dp * 4 bytes ; budget kept well under v7x's 64 MiB VMEM.
    per_step = 4 * BB * Dp * 4
    tt_max = max(1, budget_bytes // per_step)
    tt = 1
    for d in range(1, T + 1):
        if T % d == 0 and d <= tt_max:
            tt = d
    return tt


def _pick_batch_block(Bp, cap=256):
    bb = 8
    for cand in range(8, min(Bp, cap) + 1, 8):
        if Bp % cand == 0:
            bb = cand
    return bb


def pallas_process_batch(k, c, dts, state0, A, gt_tbd,
                         *, time_block=None, batch_block=None):
    """Fused T-step rollout + MSE loss.

    gt_tbd is time-major (T, B, D).  Returns (loss, preds) with preds
    time-major and padded to (T, Bp, Dp).  MSE is layout invariant, so this
    matches criterion(torch.stack(preds, dim=-1), gt) exactly while avoiding
    HBM round-trip transposes in the wrapper.
    """
    T = int(dts.shape[0])
    B, D = state0.shape

    # lane/sublane-dense padding: minor dim -> multiple of 128, batch -> mult of 8
    Dp = _round_up(D, 128)
    Bp = _round_up(B, 8)
    BB = batch_block if batch_block is not None else _pick_batch_block(Bp)
    TT = time_block if time_block is not None else _pick_time_block(T, BB, Dp)
    assert Bp % BB == 0 and T % TT == 0
    NB, NT = Bp // BB, T // TT

    f32 = jnp.float32
    params = jnp.stack([jnp.asarray(k, f32), jnp.asarray(c, f32)])
    dts = dts.astype(f32)
    # Zero padding keeps padded rows/cols identically zero through the linear
    # rollout, so they contribute exactly 0 to the squared error (no masking).
    state0_p = jnp.pad(state0.astype(f32), ((0, Bp - B), (0, Dp - D)))
    A_p = jnp.pad(A.astype(f32), ((0, Dp - D), (0, Dp - D)))
    gt_p = jnp.pad(gt_tbd.astype(f32), ((0, 0), (0, Bp - B), (0, Dp - D)))
    # TODO(synk): a real data pipeline should deliver gt/state pre-padded and
    # time-major so these pads are not extra XLA ops over the full arrays.

    grid_spec = pltpu.PrefetchScalarGridSpec(
        num_scalar_prefetch=0,
        grid=(NB, NT),
        in_specs=[
            pl.BlockSpec(memory_space=pltpu.MemorySpace.SMEM),      # params (2,)
            pl.BlockSpec(memory_space=pltpu.MemorySpace.SMEM),      # dts (T,)
            pl.BlockSpec((BB, Dp), lambda b, t: (b, 0)),            # state0 block
            pl.BlockSpec((Dp, Dp), lambda b, t: (0, 0)),            # A (resident)
            pl.BlockSpec((TT, BB, Dp), lambda b, t: (t, b, 0)),     # gt tile
        ],
        out_specs=(
            pl.BlockSpec((TT, BB, Dp), lambda b, t: (t, b, 0)),     # preds tile
            pl.BlockSpec((1, 8, 128), lambda b, t: (b, 0, 0)),      # sse partial
        ),
        scratch_shapes=[
            pltpu.VMEM((BB, Dp), f32),     # state carry
            pltpu.VMEM((BB, Dp), f32),     # squared-error accumulator
        ],
    )

    preds_p, sse_part = pl.pallas_call(
        rollout_loss_kernel,
        out_shape=(jax.ShapeDtypeStruct((T, Bp, Dp), f32),
                   jax.ShapeDtypeStruct((NB, 8, 128), f32)),
        grid_spec=grid_spec,
        compiler_params=pltpu.CompilerParams(
            dimension_semantics=("parallel", "arbitrary")),
    )(params, dts, state0_p, A_p, gt_p)

    loss = jnp.sum(sse_part[:, 0, 0]) / f32(T * B * D)   # mean over real elements
    return loss, preds_p


class PallasTrainingEngine:
    """Mirrors AbstractTrainingEngine.forward / process_batch_data semantics.

    trainable_params: {'stiffness', 'damping'} scalar params
    other_params:     {'A': (D, D) dynamics matrix}
    criterion:        MSE
    """
    # TODO(synk): optimizer / scheduler / backward / DataLoader epoch loops are
    # training infrastructure (Adam, ExponentialLR, tqdm) with no Pallas
    # equivalent; only the forward pass (rollout -> stack -> MSE) is implemented.

    def __init__(self, trainable_params, other_params,
                 time_block=None, batch_block=None):
        self.trainable_params = trainable_params
        self.other_params = other_params
        self.time_block = time_block
        self.batch_block = batch_block

    def forward(self, batch_data):
        # process_batch_data: (batch_x, batch_gt_y, batch_t)
        batch_x, batch_gt_y, _batch_t = batch_data
        state0 = batch_x[0]['curr_state']        # only the first seeds the rollout
        dts = jnp.stack([d['dt'] for d in batch_x])
        loss, _preds = pallas_process_batch(
            self.trainable_params['stiffness'],
            self.trainable_params['damping'],
            dts, state0, self.other_params['A'], batch_gt_y,
            time_block=self.time_block, batch_block=self.batch_block)
        return loss

    __call__ = forward


def _reference_loss(k, c, dts, state0, A, gt_tbd):
    """Pure-JAX reference replicating the engine semantics exactly."""
    state = state0
    preds = []
    for t in range(dts.shape[0]):
        dt = dts[t]
        state = (1.0 - dt * c) * state + (dt * k) * jnp.dot(
            state, A, precision=lax.Precision.HIGHEST)
        preds.append(state)
    pred_tbd = jnp.stack(preds, axis=0)   # time-major; MSE is layout invariant
    return jnp.mean((pred_tbd - gt_tbd) ** 2)


if __name__ == "__main__":
    B, D, T = 2, 32, 8
    key = jax.random.PRNGKey(0)
    k1, k2, k3 = jax.random.split(key, 3)

    # deterministic synthetic parameter init
    stiffness = jnp.float32(0.5)
    damping = jnp.float32(0.1)
    A = (jax.random.normal(k1, (D, D), dtype=jnp.float32) * 0.05
         + jnp.eye(D, dtype=jnp.float32) * 0.01)

    # batch_x: list of T data dicts; only the first curr_state seeds the rollout
    state0 = jax.random.normal(k2, (B, D), dtype=jnp.float32)
    dts = jnp.linspace(0.005, 0.02, T, dtype=jnp.float32)
    batch_x = [{'curr_state': state0, 'dt': dts[t]} for t in range(T)]
    # gt supplied time-major (T, B, D): avoids a (B,D,T)->(T,B,D) transpose
    # round-trip through HBM; the MSE value is identical.
    batch_gt_y = jax.random.normal(k3, (T, B, D), dtype=jnp.float32)
    batch_t = jnp.arange(T, dtype=jnp.float32)

    # time_block=2 -> grid NT=4: exercises the pipelined time-streaming path
    engine = PallasTrainingEngine(
        trainable_params={'stiffness': stiffness, 'damping': damping},
        other_params={'A': A},
        time_block=2)

    loss = engine((batch_x, batch_gt_y, batch_t))
    loss = jax.block_until_ready(loss)

    ref = _reference_loss(stiffness, damping, dts, state0, A, batch_gt_y)
    assert jnp.allclose(loss, ref, rtol=2e-4, atol=1e-6), (loss, ref)

    print("KERNEL_OK")
</pallas_src>

<mosaic_0001>
module attributes {stable_mosaic.version = 11 : i64} {
  func.func @rollout_loss_kernel(%arg0: i32, %arg1: i32, %arg2: memref<2xf32, #tpu.memory_space<smem>>, %arg3: memref<8xf32, #tpu.memory_space<smem>>, %arg4: memref<8x128xf32, #tpu.memory_space<vmem>>, %arg5: memref<128x128xf32, #tpu.memory_space<vmem>>, %arg6: memref<2x8x128xf32, #tpu.memory_space<vmem>>, %arg7: memref<2x8x128xf32, #tpu.memory_space<vmem>>, %arg8: memref<1x8x128xf32, #tpu.memory_space<vmem>>, %arg9: memref<8x128xf32, #tpu.memory_space<vmem>>, %arg10: memref<8x128xf32, #tpu.memory_space<vmem>>) attributes {dimension_semantics = [#tpu.dimension_semantics<parallel>, #tpu.dimension_semantics<arbitrary>], iteration_bounds = array<i64: 1, 4>, scalar_prefetch = 0 : i64, scratch_operands = 2 : i64, tpu.core_type = #tpu.core_type<tc>, window_params = [{transform_indices = @transform_0, window_bounds = array<i64: 2>}, {transform_indices = @transform_1, window_bounds = array<i64: 8>}, {transform_indices = @transform_2, window_bounds = array<i64: 8, 128>}, {pipeline_mode = #tpu.pipeline_mode<synchronous>, transform_indices = @transform_3, window_bounds = array<i64: 128, 128>}, {transform_indices = @transform_4, window_bounds = array<i64: 2, 8, 128>}, {transform_indices = @transform_5, window_bounds = array<i64: 2, 8, 128>}, {transform_indices = @transform_6, window_bounds = array<i64: 1, 8, 128>}]} {
    %c0 = arith.constant 0 : index
    %0 = memref.load %arg2[%c0] : memref<2xf32, #tpu.memory_space<smem>>
    %c1 = arith.constant 1 : index
    %1 = memref.load %arg2[%c1] : memref<2xf32, #tpu.memory_space<smem>>
    %c0_0 = arith.constant 0 : index
    %c0_1 = arith.constant 0 : index
    %2 = vector.load %arg5[%c0_0, %c0_1] : memref<128x128xf32, #tpu.memory_space<vmem>>, vector<128x128xf32>
    %c0_i32 = arith.constant 0 : i32
    %3 = arith.cmpi eq, %arg1, %c0_i32 : i32
    %4 = arith.extui %3 : i1 to i32
    %c0_i32_2 = arith.constant 0 : i32
    %5 = arith.cmpi ne, %4, %c0_i32_2 : i32
    scf.if %5 {
      %c0_26 = arith.constant 0 : index
      %c0_27 = arith.constant 0 : index
      %59 = vector.load %arg4[%c0_26, %c0_27] : memref<8x128xf32, #tpu.memory_space<vmem>>, vector<8x128xf32>
      %c0_28 = arith.constant 0 : index
      %c0_29 = arith.constant 0 : index
      %60 = vector.load %arg9[%c0_28, %c0_29] : memref<8x128xf32, #tpu.memory_space<vmem>>, vector<8x128xf32>
      tpu.vector_store %arg9[%c0_28, %c0_29], %59 {strides = array<i32>} : memref<8x128xf32, #tpu.memory_space<vmem>>, vector<8x128xf32>,
      %cst_30 = arith.constant 0.000000e+00 : f32
      %61 = vector.broadcast %cst_30 : f32 to vector<8x128xf32>
      %c0_31 = arith.constant 0 : index
      %c0_32 = arith.constant 0 : index
      %62 = vector.load %arg10[%c0_31, %c0_32] : memref<8x128xf32, #tpu.memory_space<vmem>>, vector<8x128xf32>
      tpu.vector_store %arg10[%c0_31, %c0_32], %61 {strides = array<i32>} : memref<8x128xf32, #tpu.memory_space<vmem>>, vector<8x128xf32>,
    } else {
    }
    %c0_3 = arith.constant 0 : index
    %c0_4 = arith.constant 0 : index
    %6 = vector.load %arg9[%c0_3, %c0_4] : memref<8x128xf32, #tpu.memory_space<vmem>>, vector<8x128xf32>
    %c0_5 = arith.constant 0 : index
    %c0_6 = arith.constant 0 : index
    %7 = vector.load %arg10[%c0_5, %c0_6] : memref<8x128xf32, #tpu.memory_space<vmem>>, vector<8x128xf32>
    %c0_i32_7 = arith.constant 0 : i32
    %c2_i32 = arith.constant 2 : i32
    %8 = arith.muli %arg1, %c2_i32 : i32
    %9 = arith.addi %8, %c0_i32_7 : i32
    %10 = arith.index_cast %9 : i32 to index
    %11 = memref.load %arg3[%10] : memref<8xf32, #tpu.memory_space<smem>>
    %12 = arith.mulf %11, %1 : f32
    %cst = arith.constant 1.000000e+00 : f32
    %13 = arith.subf %cst, %12 : f32
    %14 = arith.mulf %11, %0 : f32
    %15 = vector.broadcast %13 : f32 to vector<8x128xf32>
    %16 = arith.mulf %15, %6 : vector<8x128xf32>
    %cst_8 = arith.constant dense<0.000000e+00> : vector<8x128xf32>
    %17 = tpu.matmul %6, %2, %cst_8 {dimension_numbers = #tpu.dot_dimension_numbers<[1], [0], [0], [1], [0, 0, 1, 1], [], []>} : vector<8x128xf32>, vector<128x128xf32>, vector<8x128xf32> -> vector<8x128xf32>
    %18 = vector.broadcast %14 : f32 to vector<8x128xf32>
    %19 = arith.mulf %18, %17 : vector<8x128xf32>
    %20 = arith.addf %16, %19 : vector<8x128xf32>
    %21 = arith.index_cast %c0_i32_7 : i32 to index
    %c0_9 = arith.constant 0 : index
    %c0_10 = arith.constant 0 : index
    %22 = vector.load %arg7[%21, %c0_9, %c0_10] : memref<2x8x128xf32, #tpu.memory_space<vmem>>, vector<1x8x128xf32>
    %23 = vector.shape_cast %22 : vector<1x8x128xf32> to vector<8x128xf32>
    %24 = vector.shape_cast %20 : vector<8x128xf32> to vector<1x8x128xf32>
    tpu.vector_store %arg7[%21, %c0_9, %c0_10], %24 {strides = array<i32>} : memref<2x8x128xf32, #tpu.memory_space<vmem>>, vector<1x8x128xf32>,
    %25 = arith.index_cast %c0_i32_7 : i32 to index
    %c0_11 = arith.constant 0 : index
    %c0_12 = arith.constant 0 : index
    %26 = vector.load %arg6[%25, %c0_11, %c0_12] : memref<2x8x128xf32, #tpu.memory_space<vmem>>, vector<1x8x128xf32>
    %27 = vector.shape_cast %26 : vector<1x8x128xf32> to vector<8x128xf32>
    %28 = arith.subf %20, %27 : vector<8x128xf32>
    %29 = arith.mulf %28, %28 : vector<8x128xf32>
    %30 = arith.addf %7, %29 : vector<8x128xf32>
    %c1_i32 = arith.constant 1 : i32
    %c2_i32_13 = arith.constant 2 : i32
    %31 = arith.muli %arg1, %c2_i32_13 : i32
    %32 = arith.addi %31, %c1_i32 : i32
    %33 = arith.index_cast %32 : i32 to index
    %34 = memref.load %arg3[%33] : memref<8xf32, #tpu.memory_space<smem>>
    %35 = arith.mulf %34, %1 : f32
    %cst_14 = arith.constant 1.000000e+00 : f32
    %36 = arith.subf %cst_14, %35 : f32
    %37 = arith.mulf %34, %0 : f32
    %38 = vector.broadcast %36 : f32 to vector<8x128xf32>
    %39 = arith.mulf %38, %20 : vector<8x128xf32>
    %cst_15 = arith.constant dense<0.000000e+00> : vector<8x128xf32>
    %40 = tpu.matmul %20, %2, %cst_15 {dimension_numbers = #tpu.dot_dimension_numbers<[1], [0], [0], [1], [0, 0, 1, 1], [], []>} : vector<8x128xf32>, vector<128x128xf32>, vector<8x128xf32> -> vector<8x128xf32>
    %41 = vector.broadcast %37 : f32 to vector<8x128xf32>
    %42 = arith.mulf %41, %40 : vector<8x128xf32>
    %43 = arith.addf %39, %42 : vector<8x128xf32>
    %44 = arith.index_cast %c1_i32 : i32 to index
    %c0_16 = arith.constant 0 : index
    %c0_17 = arith.constant 0 : index
    %45 = vector.load %arg7[%44, %c0_16, %c0_17] : memref<2x8x128xf32, #tpu.memory_space<vmem>>, vector<1x8x128xf32>
    %46 = vector.shape_cast %45 : vector<1x8x128xf32> to vector<8x128xf32>
    %47 = vector.shape_cast %43 : vector<8x128xf32> to vector<1x8x128xf32>
    tpu.vector_store %arg7[%44, %c0_16, %c0_17], %47 {strides = array<i32>} : memref<2x8x128xf32, #tpu.memory_space<vmem>>, vector<1x8x128xf32>,
    %48 = arith.index_cast %c1_i32 : i32 to index
    %c0_18 = arith.constant 0 : index
    %c0_19 = arith.constant 0 : index
    %49 = vector.load %arg6[%48, %c0_18, %c0_19] : memref<2x8x128xf32, #tpu.memory_space<vmem>>, vector<1x8x128xf32>
    %50 = vector.shape_cast %49 : vector<1x8x128xf32> to vector<8x128xf32>
    %51 = arith.subf %43, %50 : vector<8x128xf32>
    %52 = arith.mulf %51, %51 : vector<8x128xf32>
    %53 = arith.addf %30, %52 : vector<8x128xf32>
    %c2_i32_20 = arith.constant 2 : i32
    %c0_21 = arith.constant 0 : index
    %c0_22 = arith.constant 0 : index
    %54 = vector.load %arg9[%c0_21, %c0_22] : memref<8x128xf32, #tpu.memory_space<vmem>>, vector<8x128xf32>
    tpu.vector_store %arg9[%c0_21, %c0_22], %43 {strides = array<i32>} : memref<8x128xf32, #tpu.memory_space<vmem>>, vector<8x128xf32>,
    %c0_23 = arith.constant 0 : index
    %c0_24 = arith.constant 0 : index
    %55 = vector.load %arg10[%c0_23, %c0_24] : memref<8x128xf32, #tpu.memory_space<vmem>>, vector<8x128xf32>
    tpu.vector_store %arg10[%c0_23, %c0_24], %53 {strides = array<i32>} : memref<8x128xf32, #tpu.memory_space<vmem>>, vector<8x128xf32>,
    %c3_i32 = arith.constant 3 : i32
    %56 = arith.cmpi eq, %arg1, %c3_i32 : i32
    %57 = arith.extui %56 : i1 to i32
    %c0_i32_25 = arith.constant 0 : i32
    %58 = arith.cmpi ne, %57, %c0_i32_25 : i32
    scf.if %58 {
      %59 = vector.shape_cast %53 : vector<8x128xf32> to vector<1x8x128xf32>
      %cst_26 = arith.constant dense<0.000000e+00> : vector<1xf32>
      %60 = vector.multi_reduction <add>, %59, %cst_26 [1, 2] : vector<1x8x128xf32> to vector<1xf32>
      %61 = vector.shape_cast %60 : vector<1xf32> to vector<1x1x1xf32>
      %62 = vector.extract %61[0, 0, 0] : f32 from vector<1x1x1xf32>
      %cst_27 = arith.constant 0.000000e+00 : f32
      %63 = vector.broadcast %cst_27 : f32 to vector<1x8x128xf32>
      %64 = vector.broadcast %62 : f32 to vector<1x8x128xf32>
      %65 = arith.addf %64, %63 : vector<1x8x128xf32>
      %c0_28 = arith.constant 0 : index
      %c0_29 = arith.constant 0 : index
      %c0_30 = arith.constant 0 : index
      %66 = vector.load %arg8[%c0_28, %c0_29, %c0_30] : memref<1x8x128xf32, #tpu.memory_space<vmem>>, vector<1x8x128xf32>
      tpu.vector_store %arg8[%c0_28, %c0_29, %c0_30], %65 {strides = array<i32>} : memref<1x8x128xf32, #tpu.memory_space<vmem>>, vector<1x8x128xf32>,
    } else {
    }
    return
  }
  func.func @transform_0(%arg0: i32, %arg1: i32) -> i32 {
    %c0_i32 = arith.constant 0 : i32
    %c0_i32_0 = arith.constant 0 : i32
    return %c0_i32 : i32
  }
  func.func @transform_1(%arg0: i32, %arg1: i32) -> i32 {
    %c0_i32 = arith.constant 0 : i32
    %c0_i32_0 = arith.constant 0 : i32
    return %c0_i32 : i32
  }
  func.func @transform_2(%arg0: i32, %arg1: i32) -> (i32, i32) {
    %c0_i32 = arith.constant 0 : i32
    %c0_i32_0 = arith.constant 0 : i32
    return %arg0, %c0_i32 : i32, i32
  }
  func.func @transform_3(%arg0: i32, %arg1: i32) -> (i32, i32) {
    %c0_i32 = arith.constant 0 : i32
    %c0_i32_0 = arith.constant 0 : i32
    %c0_i32_1 = arith.constant 0 : i32
    return %c0_i32, %c0_i32_0 : i32, i32
  }
  func.func @transform_4(%arg0: i32, %arg1: i32) -> (i32, i32, i32) {
    %c0_i32 = arith.constant 0 : i32
    %c0_i32_0 = arith.constant 0 : i32
    return %arg1, %arg0, %c0_i32 : i32, i32, i32
  }
  func.func @transform_5(%arg0: i32, %arg1: i32) -> (i32, i32, i32) {
    %c0_i32 = arith.constant 0 : i32
    %c0_i32_0 = arith.constant 0 : i32
    return %arg1, %arg0, %c0_i32 : i32, i32, i32
  }
  func.func @transform_6(%arg0: i32, %arg1: i32) -> (i32, i32, i32) {
    %c0_i32 = arith.constant 0 : i32
    %c0_i32_0 = arith.constant 0 : i32
    %c0_i32_1 = arith.constant 0 : i32
    return %arg0, %c0_i32, %c0_i32_0 : i32, i32, i32
  }
}

</mosaic_0001>

<llo_original>
// kernel: tpu_custom_call.1
$region0: #{tpu_custom_call.1}
  #allocation0 [shape = 'u32[]', space=smem, size = 0x4, offset = 0x4, fixed_abs, tag = 'smem constant byte address 0x4 - core index']
  #allocation1 [shape = 'u32[144,128]{1,0:T(1,128)}', space=vmem, size = 0x12000, scoped, tag = 'internal scratch']
  #allocation2 [shape = 'f32[8,128]{1,0:T(8,128)}', space=vmem, size = 0x1000, scoped, tag = 'scratch operand']
  #allocation3 [shape = 'f32[8,128]{1,0:T(8,128)}', space=vmem, size = 0x1000, scoped, tag = 'scratch operand']
  %s0 = inlined_call_operand.hbm [shape: f32[2], index: 0, kind: input, shape index: {}]
  %s1 = inlined_call_operand.vmem [shape: f32[8], index: 1, kind: input, shape index: {}]
  %s2 = inlined_call_operand.hbm [shape: f32[8,128], index: 2, kind: input, shape index: {}]
  %s3 = inlined_call_operand.hbm [shape: f32[128,128], index: 3, kind: input, shape index: {}]
  %s4 = inlined_call_operand.hbm [shape: f32[8,8,128], index: 4, kind: input, shape index: {}]
  %s5 = inlined_call_operand.hbm [shape: f32[8,8,128], index: 5, kind: output, shape index: {0}]
  %s6 = inlined_call_operand.hbm [shape: f32[1,8,128], index: 6, kind: output, shape index: {1}]
  %7 = xla_tuple %s5, %s6
  %s8 = sld [smem:[#allocation0]]
  $region89: #{tpu_custom_call.1} parent=0
    _
  %s10 = ssub.s32 1, %s8
  %s11 = scalar_select 0, %s10, %s8
  $region1: #{tpu_custom_call.1} parent=0
    #allocation4 [shape = 'u8[512]{0}', space=smem, size = 0x200, scoped, tag = 'input window, operand 0, single buffered']
    #allocation5 [shape = 's32[2]{0}', space=sflag, size = 0x8, scoped, tag = 'scoped memory for tpu_custom_call.1']
    #allocation6 [shape = 's32[2]{0}', space=sflag, size = 0x8, scoped, tag = 'scoped memory for tpu_custom_call.1']
    #allocation7 [shape = 's32[2]{0}', space=sflag, size = 0x8, scoped, tag = 'scoped memory for tpu_custom_call.1']
    #allocation8 [shape = 's32[2]{0}', space=sflag, size = 0x8, scoped, tag = 'scoped memory for tpu_custom_call.1']
    #allocation9 [shape = 'u8[512]{0}', space=smem, size = 0x200, scoped, tag = 'input window, operand 1, single buffered']
    #allocation10 [shape = 'u8[4096]{0}', space=vmem, size = 0x1000, scoped, tag = 'input window, operand 2, single buffered']
    #allocation11 [shape = 'u8[65536]{0}', space=vmem, size = 0x10000, scoped, tag = 'input window, operand 3, single buffered']
    #allocation12 [shape = 's32[1]{0}', space=sflag, size = 0x4, scoped, tag = 'scoped memory for tpu_custom_call.1']
    #allocation13 [shape = 'u8[16384]{0}', space=vmem, size = 0x4000, scoped, tag = 'input window, operand 4']
    #allocation14 [shape = 'u8[16384]{0}', space=vmem, size = 0x4000, scoped, tag = 'output window, operand 0']
    #allocation15 [shape = 'u8[4096]{0}', space=vmem, size = 0x1000, scoped, tag = 'output window, operand 1, single buffered']
    #allocation16 [shape = 's32[1]{0}', space=sflag, size = 0x4, scoped, tag = 'scoped memory for tpu_custom_call.1']
    %12 = vsyncpa [#allocation7], 0
    %13 = vsyncpa [#allocation8], 0
    %14 = vsyncpa [#allocation5], 0
    %15 = vsyncpa [#allocation12], 0
    %16 = vsyncpa [#allocation6], 0
    %s17 = scalar_lea.sflag [#allocation6], 1
    %18 = vsyncpa %s17, 0
    %19 = vsyncpa [#allocation16], 0
    loop: start=0, step=1, limit=6
    $region2: #{tpu_custom_call.1} parent=1 // loop_pre_header
      _
    $region3: #{tpu_custom_call.1} parent=1 // loop_header
      %s21 = sphi 0, %s25
      %p22 = scmp.ge.s32.totalorder %s21, 6
      %s28 = sphi 0, %s40
      %s29 = sphi 0, %s36
      %s30 = sphi 0, %s28
      %s31 = sphi 0, %s29
      %s32 = sphi 0, %s30
      %s33 = sphi 0, %s31
      %s41 = sphi 0, %s41
      %s43 = sphi 0, %s41
      %s44 = sphi 0, %s43
      %s58 = sphi 0, %s44
      %s62 = sphi 0, %s62
      %s64 = sphi 0, %s62
      %s65 = sphi 0, %s64
      %s79 = sphi 0, %s65
      %s85 = sphi 0, %s87
      %s88 = sphi 0, %s85
      %s89 = sphi 0, %s88
      %s105 = sphi 0, %s89
      %s109 = sphi 0, %s109
      %s111 = sphi 0, %s109
      %s112 = sphi 0, %s111
      %s126 = sphi 0, %s112
      %s134 = sphi 0, %s136
      %s137 = sphi 0, %s134
      %s138 = sphi 0, %s137
      %s154 = sphi 0, %s138
      %s162 = sphi 0, %s164
      %s165 = sphi 0, %s162
      %s166 = sphi 0, %s165
      %s182 = sphi 0, %s166
      %s188 = sphi 0, %s190
      %s191 = sphi 0, %s188
      %s192 = sphi 0, %s191
      %s208 = sphi 0, %s192
    $region4: #{tpu_custom_call.1} parent=1 // loop_header_branch
      %24 = sbr.rel (%p22) target = $region8
    $region5: #{tpu_custom_call.1} parent=1 // loop_body
      %s26 = ssub.s32 %s21, 1
      %s27 = ssub.s32 %s21, 2
      %s34 = sadd.s32 1, %s29
      %p35 = scmp.ge.s32.totalorder %s34, 4
      %s36 = scalar_select %p35, 0, %s34
      %s37 = sadd.s32 1, %s28
      %s38 = scalar_select %p35, %s37, %s28
      %p39 = scmp.ge.s32.totalorder %s38, 1
      %s40 = scalar_select %p39, 0, %s38
      %s42 = sadd.s32 %s41, 1
      %p45 = scmp.eq.s32.totalorder %s21, 3
      %p46 = scmp.ne.s32.totalorder %s41, %s43
      %p47 = scmp.eq.s32.totalorder %s21, 0
      %p48 = por %p46, %p47
      %p49 = scmp.ne.s32.totalorder %s41, %s43
      %p50 = scmp.eq.s32.totalorder %s26, 3
      %p51 = por %p49, %p50
      %p52 = scmp.ne.s32.totalorder %s43, %s44
      %p53 = scmp.eq.s32.totalorder %s26, 0
      %p54 = por %p52, %p53
      %p55 = scmp.ne.s32.totalorder %s43, %s44
      %p56 = scmp.eq.s32.totalorder %s27, 3
      %p57 = por %p55, %p56
      %p59 = scmp.ne.s32.totalorder %s44, %s58
      %p60 = scmp.eq.s32.totalorder %s27, 0
      %p61 = por %p59, %p60
      %s63 = sadd.s32 %s62, 1
      %p66 = scmp.eq.s32.totalorder %s21, 3
      %p67 = scmp.ne.s32.totalorder %s62, %s64
      %p68 = scmp.eq.s32.totalorder %s21, 0
      %p69 = por %p67, %p68
      %p70 = scmp.ne.s32.totalorder %s62, %s64
      %p71 = scmp.eq.s32.totalorder %s26, 3
      %p72 = por %p70, %p71
      %p73 = scmp.ne.s32.totalorder %s64, %s65
      %p74 = scmp.eq.s32.totalorder %s26, 0
      %p75 = por %p73, %p74
      %p76 = scmp.ne.s32.totalorder %s64, %s65
      %p77 = scmp.eq.s32.totalorder %s27, 3
      %p78 = por %p76, %p77
      %p80 = scmp.ne.s32.totalorder %s65, %s79
      %p81 = scmp.eq.s32.totalorder %s27, 0
      %p82 = por %p80, %p81
      %s83 = ssub.s32 %s28, %s40
      %p84 = scmp.eq.s32.totalorder %s83, 0
      %s86 = sadd.s32 %s85, 1
      %s87 = scalar_select %p84, %s85, %s86
      %p90 = pneg %p84
      %p91 = scmp.eq.s32.totalorder %s21, 3
      %p92 = por %p90, %p91
      %p93 = scmp.ne.s32.totalorder %s85, %s88
      %p94 = scmp.eq.s32.totalorder %s21, 0
      %p95 = por %p93, %p94
      %p96 = scmp.ne.s32.totalorder %s85, %s88
      %p97 = scmp.eq.s32.totalorder %s26, 3
      %p98 = por %p96, %p97
      %p99 = scmp.ne.s32.totalorder %s88, %s89
      %p100 = scmp.eq.s32.totalorder %s26, 0
      %p101 = por %p99, %p100
      %p102 = scmp.ne.s32.totalorder %s88, %s89
      %p103 = scmp.eq.s32.totalorder %s27, 3
      %p104 = por %p102, %p103
      %p106 = scmp.ne.s32.totalorder %s89, %s105
      %p107 = scmp.eq.s32.totalorder %s27, 0
      %p108 = por %p106, %p107
      %s110 = sadd.s32 %s109, 1
      %p113 = scmp.eq.s32.totalorder %s21, 3
      %p114 = scmp.ne.s32.totalorder %s109, %s111
      %p115 = scmp.eq.s32.totalorder %s21, 0
      %p116 = por %p114, %p115
      %p117 = scmp.ne.s32.totalorder %s109, %s111
      %p118 = scmp.eq.s32.totalorder %s26, 3
      %p119 = por %p117, %p118
      %p120 = scmp.ne.s32.totalorder %s111, %s112
      %p121 = scmp.eq.s32.totalorder %s26, 0
      %p122 = por %p120, %p121
      %p123 = scmp.ne.s32.totalorder %s111, %s112
      %p124 = scmp.eq.s32.totalorder %s27, 3
      %p125 = por %p123, %p124
      %p127 = scmp.ne.s32.totalorder %s112, %s126
      %p128 = scmp.eq.s32.totalorder %s27, 0
      %p129 = por %p127, %p128
      %s130 = ssub.s32 %s29, %s36
      %s131 = ssub.s32 %s28, %s40
      %s132 = sor.u32 %s130, %s131
      %p133 = scmp.eq.s32.totalorder %s132, 0
      %s135 = sadd.s32 %s134, 1
      %s136 = scalar_select %p133, %s134, %s135
      %p139 = pneg %p133
      %p140 = scmp.eq.s32.totalorder %s21, 3
      %p141 = por %p139, %p140
      %p142 = scmp.ne.s32.totalorder %s134, %s137
      %p143 = scmp.eq.s32.totalorder %s21, 0
      %p144 = por %p142, %p143
      %p145 = scmp.ne.s32.totalorder %s134, %s137
      %p146 = scmp.eq.s32.totalorder %s26, 3
      %p147 = por %p145, %p146
      %p148 = scmp.ne.s32.totalorder %s137, %s138
      %p149 = scmp.eq.s32.totalorder %s26, 0
      %p150 = por %p148, %p149
      %p151 = scmp.ne.s32.totalorder %s137, %s138
      %p152 = scmp.eq.s32.totalorder %s27, 3
      %p153 = por %p151, %p152
      %p155 = scmp.ne.s32.totalorder %s138, %s154
      %p156 = scmp.eq.s32.totalorder %s27, 0
      %p157 = por %p155, %p156
      %s158 = ssub.s32 %s29, %s36
      %s159 = ssub.s32 %s28, %s40
      %s160 = sor.u32 %s158, %s159
      %p161 = scmp.eq.s32.totalorder %s160, 0
      %s163 = sadd.s32 %s162, 1
      %s164 = scalar_select %p161, %s162, %s163
      %p167 = pneg %p161
      %p168 = scmp.eq.s32.totalorder %s21, 3
      %p169 = por %p167, %p168
      %p170 = scmp.ne.s32.totalorder %s162, %s165
      %p171 = scmp.eq.s32.totalorder %s21, 0
      %p172 = por %p170, %p171
      %p173 = scmp.ne.s32.totalorder %s162, %s165
      %p174 = scmp.eq.s32.totalorder %s26, 3
      %p175 = por %p173, %p174
      %p176 = scmp.ne.s32.totalorder %s165, %s166
      %p177 = scmp.eq.s32.totalorder %s26, 0
      %p178 = por %p176, %p177
      %p179 = scmp.ne.s32.totalorder %s165, %s166
      %p180 = scmp.eq.s32.totalorder %s27, 3
      %p181 = por %p179, %p180
      %p183 = scmp.ne.s32.totalorder %s166, %s182
      %p184 = scmp.eq.s32.totalorder %s27, 0
      %p185 = por %p183, %p184
      %s186 = ssub.s32 %s28, %s40
      %p187 = scmp.eq.s32.totalorder %s186, 0
      %s189 = sadd.s32 %s188, 1
      %s190 = scalar_select %p187, %s188, %s189
      %p193 = pneg %p187
      %p194 = scmp.eq.s32.totalorder %s21, 3
      %p195 = por %p193, %p194
      %p196 = scmp.ne.s32.totalorder %s188, %s191
      %p197 = scmp.eq.s32.totalorder %s21, 0
      %p198 = por %p196, %p197
      %p199 = scmp.ne.s32.totalorder %s188, %s191
      %p200 = scmp.eq.s32.totalorder %s26, 3
      %p201 = por %p199, %p200
      %p202 = scmp.ne.s32.totalorder %s191, %s192
      %p203 = scmp.eq.s32.totalorder %s26, 0
      %p204 = por %p202, %p203
      %p205 = scmp.ne.s32.totalorder %s191, %s192
      %p206 = scmp.eq.s32.totalorder %s27, 3
      %p207 = por %p205, %p206
      %p209 = scmp.ne.s32.totalorder %s192, %s208
      %p210 = scmp.eq.s32.totalorder %s27, 0
      %p211 = por %p209, %p210
      %p212 = scmp.le.s32.totalorder 1, %s21
      %p213 = scmp.lt.s32.totalorder %s21, 5
      %p214 = pnand %p212, %p213
      %p215 = pneg %p214
      // Predicated region
      $region9: #{tpu_custom_call.1} parent=5 // pred_check
        _
      $region10: #{tpu_custom_call.1} parent=5 // pred_check_branch
        %217 = sbr.rel (%p214) target = $region12
      $region11: #{tpu_custom_call.1} parent=5 // pred_region
        %s218 = ssub.s32 %s21, 1
        // Predicated region
        $region13: #{tpu_custom_call.1} parent=11 // pred_check
          %p219 = pneg %p54
        $region14: #{tpu_custom_call.1} parent=11 // pred_check_branch
          %221 = sbr.rel (%p219) target = $region16
        $region15: #{tpu_custom_call.1} parent=11 // pred_region
          %s223 = ssub.s32 16, 16
          %224 = vsyncadd [#allocation7], %s223
          %227 = dma.hbm_to_smem %s0, 16, [#allocation4], [#allocation7]
        $region16: #{tpu_custom_call.1} parent=11 // pred_fallthru
          _
        // Predicated region
        $region17: #{tpu_custom_call.1} parent=11 // pred_check
          %p228 = pneg %p75
        $region18: #{tpu_custom_call.1} parent=11 // pred_check_branch
          %230 = sbr.rel (%p228) target = $region20
        $region19: #{tpu_custom_call.1} parent=11 // pred_region
          %s232 = ssub.s32 16, 16
          %233 = vsyncadd [#allocation8], %s232
          %s235 = sshll.u32 %s1, 4
          %s236 = int_to_ptr.vmem [resolvable:$true] %s235
          %238 = dma.vmem_to_smem %s236, 16, [#allocation9], [#allocation8]
        $region20: #{tpu_custom_call.1} parent=11 // pred_fallthru
          _
        // Predicated region
        $region21: #{tpu_custom_call.1} parent=11 // pred_check
          %p239 = pneg %p101
        $region22: #{tpu_custom_call.1} parent=11 // pred_check_branch
          %241 = sbr.rel (%p239) target = $region24
        $region23: #{tpu_custom_call.1} parent=11 // pred_region
          %s243 = ssub.s32 128, 128
          %244 = vsyncadd [#allocation5], %s243
          %s245 = smul.addr %s30, 128
          %s246 = scalar_lea.hbm %s2, %s245
          %s248 = sshll.u32 [#allocation10], 4
          %s249 = int_to_ptr.vmem [resolvable:$true] %s248
          %251 = dma.hbm_to_vmem [thread:$0]  %s246, 128, %s249, [#allocation5]
        $region24: #{tpu_custom_call.1} parent=11 // pred_fallthru
          _
        // Predicated region
        $region25: #{tpu_custom_call.1} parent=11 // pred_check
          %p252 = pneg %p122
        $region26: #{tpu_custom_call.1} parent=11 // pred_check_branch
          %254 = sbr.rel (%p252) target = $region28
        $region27: #{tpu_custom_call.1} parent=11 // pred_region
          %s256 = ssub.s32 2048, 2048
          %257 = vsyncadd [#allocation12], %s256
          %s258 = sshll.u32 [#allocation11], 4
          %s259 = int_to_ptr.vmem [resolvable:$true] %s258
          %264 = dma.hbm_to_vmem [thread:$0]  %s3, 2048, %s259, [#allocation12], 128, 128, 8
        $region28: #{tpu_custom_call.1} parent=11 // pred_fallthru
          _
      $region12: #{tpu_custom_call.1} parent=5 // pred_fallthru
        _
      %p265 = scmp.lt.s32.totalorder %s21, 4
      // Predicated region
      $region29: #{tpu_custom_call.1} parent=5 // pred_check
        %p266 = pneg %p265
      $region30: #{tpu_custom_call.1} parent=5 // pred_check_branch
        %268 = sbr.rel (%p266) target = $region32
      $region31: #{tpu_custom_call.1} parent=5 // pred_region
        // Predicated region
        $region33: #{tpu_custom_call.1} parent=31 // pred_check
          %p269 = pneg %p144
        $region34: #{tpu_custom_call.1} parent=31 // pred_check_branch
          %271 = sbr.rel (%p269) target = $region36
        $region35: #{tpu_custom_call.1} parent=31 // pred_region
          %s272 = sand.u32 %s21, 1
          %s273 = scalar_lea.sflag [#allocation5], %s272
          %s274 = sand.u32 %s134, 1
          %s275 = smul.addr %s274, 16
          %s276 = scalar_lea.vmem [#allocation13], %s275
          %s277 = smul.u32 2, %s29
          %s279 = ssub.s32 256, 256
          %280 = vsyncadd %s273, %s279
          %s281 = sadd.s32 %s28, %s277
          %s282 = smul.addr %s281, 128
          %s283 = scalar_lea.hbm %s4, %s282
          %s284 = sshll.u32 %s276, 4
          %s285 = int_to_ptr.vmem [resolvable:$true] %s284
          %290 = dma.hbm_to_vmem [thread:$0]  %s283, 256, %s285, %s273, 128, 128, 8
        $region36: #{tpu_custom_call.1} parent=31 // pred_fallthru
          _
      $region32: #{tpu_custom_call.1} parent=5 // pred_fallthru
        _
      %p291 = scmp.le.s32.totalorder 1, %s21
      %p292 = scmp.lt.s32.totalorder %s21, 5
      %p293 = pnand %p291, %p292
      %p294 = pneg %p293
      // Predicated region
      $region37: #{tpu_custom_call.1} parent=5 // pred_check
        _
      $region38: #{tpu_custom_call.1} parent=5 // pred_check_branch
        %296 = sbr.rel (%p293) target = $region40
      $region39: #{tpu_custom_call.1} parent=5 // pred_region
        %s297 = ssub.s32 %s21, 1
        // Predicated region
        $region41: #{tpu_custom_call.1} parent=39 // pred_check
          %p298 = pneg %p54
        $region42: #{tpu_custom_call.1} parent=39 // pred_check_branch
          %300 = sbr.rel (%p298) target = $region44
        $region43: #{tpu_custom_call.1} parent=39 // pred_region
          %301 = dma.done [#allocation7], 16
        $region44: #{tpu_custom_call.1} parent=39 // pred_fallthru
          _
        // Predicated region
        $region45: #{tpu_custom_call.1} parent=39 // pred_check
          %p302 = pneg %p75
        $region46: #{tpu_custom_call.1} parent=39 // pred_check_branch
          %304 = sbr.rel (%p302) target = $region48
        $region47: #{tpu_custom_call.1} parent=39 // pred_region
          %305 = dma.done [#allocation8], 16
        $region48: #{tpu_custom_call.1} parent=39 // pred_fallthru
          _
        // Predicated region
        $region49: #{tpu_custom_call.1} parent=39 // pred_check
          %p306 = pneg %p101
        $region50: #{tpu_custom_call.1} parent=39 // pred_check_branch
          %308 = sbr.rel (%p306) target = $region52
        $region51: #{tpu_custom_call.1} parent=39 // pred_region
          %309 = dma.done [#allocation5], 128
        $region52: #{tpu_custom_call.1} parent=39 // pred_fallthru
          _
        // Predicated region
        $region53: #{tpu_custom_call.1} parent=39 // pred_check
          %p310 = pneg %p122
        $region54: #{tpu_custom_call.1} parent=39 // pred_check_branch
          %312 = sbr.rel (%p310) target = $region56
        $region55: #{tpu_custom_call.1} parent=39 // pred_region
          %313 = dma.done [#allocation12], 2048
        $region56: #{tpu_custom_call.1} parent=39 // pred_fallthru
          _
        %s314 = sand.u32 %s26, 1
        %s315 = scalar_lea.sflag [#allocation5], %s314
        %s316 = sand.u32 %s137, 1
        %s317 = smul.addr %s316, 16
        %s318 = scalar_lea.vmem [#allocation13], %s317
        // Predicated region
        $region57: #{tpu_custom_call.1} parent=39 // pred_check
          %p319 = pneg %p150
        $region58: #{tpu_custom_call.1} parent=39 // pred_check_branch
          %321 = sbr.rel (%p319) target = $region60
        $region59: #{tpu_custom_call.1} parent=39 // pred_region
          %322 = dma.done %s315, 256
        $region60: #{tpu_custom_call.1} parent=39 // pred_fallthru
          _
        %323 = sfence
        %p324 = pneg %p54
        %p325 = pneg %p51
        %p326 = pneg %p75
        %p327 = pneg %p72
        %p328 = pneg %p101
        %p329 = pneg %p98
        %p330 = pneg %p122
        %p331 = pneg %p119
        %s332 = sand.u32 %s26, 1
        %s333 = scalar_lea.sflag [#allocation5], %s332
        %s334 = sand.u32 %s137, 1
        %s335 = smul.addr %s334, 16
        %s336 = scalar_lea.vmem [#allocation13], %s335
        %p337 = pneg %p150
        %p338 = pneg %p147
        %p339 = pneg %p178
        %p340 = pneg %p175
        %s341 = sand.u32 %s165, 1
        %s342 = scalar_lea.sflag [#allocation6], %s341
        %s343 = sand.u32 %s165, 1
        %s344 = smul.addr %s343, 16
        %s345 = scalar_lea.vmem [#allocation14], %s344
        %p346 = pneg %p204
        %p347 = pneg %p201
        %s348 = smul.u32 2, %s31
        %s349 = smul.u32 2, %s31
        %s350 = sld [smem:[#allocation4]]
        %s351 = sld [smem:[#allocation4 + $0x1]]
        %v352 = vld [vmem:[#allocation11] sm:$0xff]
        %v353 = vld [vmem:[#allocation11 + $0x8] sm:$0xff]
        %v354 = vld [vmem:[#allocation11 + $0x10] sm:$0xff]
        %v355 = vld [vmem:[#allocation11 + $0x18] sm:$0xff]
        %v356 = vld [vmem:[#allocation11 + $0x20] sm:$0xff]
        %v357 = vld [vmem:[#allocation11 + $0x28] sm:$0xff]
        %v358 = vld [vmem:[#allocation11 + $0x30] sm:$0xff]
        %v359 = vld [vmem:[#allocation11 + $0x38] sm:$0xff]
        %v360 = vld [vmem:[#allocation11 + $0x40] sm:$0xff]
        %v361 = vld [vmem:[#allocation11 + $0x48] sm:$0xff]
        %v362 = vld [vmem:[#allocation11 + $0x50] sm:$0xff]
        %v363 = vld [vmem:[#allocation11 + $0x58] sm:$0xff]
        %v364 = vld [vmem:[#allocation11 + $0x60] sm:$0xff]
        %v365 = vld [vmem:[#allocation11 + $0x68] sm:$0xff]
        %v366 = vld [vmem:[#allocation11 + $0x70] sm:$0xff]
        %v367 = vld [vmem:[#allocation11 + $0x78] sm:$0xff]
        %p368 = scmp.eq.s32.totalorder %s31, 0
        // Predicated region
        $region61: #{tpu_custom_call.1} parent=39 // pred_check
          %p369 = pneg %p368
        $region62: #{tpu_custom_call.1} parent=39 // pred_check_branch
          %371 = sbr.rel (%p369) target = $region64
        $region63: #{tpu_custom_call.1} parent=39 // pred_region
          %v372 = vld [vmem:[#allocation10] sm:$0xff]
          %373 = vst [vmem:[#allocation2] sm:$0xff] %v372
          %374 = vst [vmem:[#allocation3] sm:$0xff] 0.0
        $region64: #{tpu_custom_call.1} parent=39 // pred_fallthru
          _
        %v375 = vld [vmem:[#allocation2] sm:$0xff]
        %v376 = vld [vmem:[#allocation3] sm:$0xff]
        %s377 = smul.u32 %s31, 2
        %s378 = sld [smem:[#allocation9 + %s377]]
        %s379 = smul.f32 %s378, %s351
        %s380 = ssub.f32 1.0, %s379
        %s381 = smul.f32 %s378, %s350
        %v382 = vstv %s380
        %v383 = vmul.f32 %v382, %v375
        %384 = vmatprep.subr.mxu0 0.0
        %385 = vmatpush1.msra.mxu0 %v367
        %386 = vmatprep.subr.mxu0 0.0
        %387 = vmatpush1.msra.mxu0 %v366
        %388 = vmatprep.subr.mxu0 0.0
        %389 = vmatpush1.msra.mxu0 %v365
        %390 = vmatprep.subr.mxu0 0.0
        %391 = vmatpush1.msra.mxu0 %v364
        %392 = vmatprep.subr.mxu0 0.0
        %393 = vmatpush1.msra.mxu0 %v363
        %394 = vmatprep.subr.mxu0 0.0
        %395 = vmatpush1.msra.mxu0 %v362
        %396 = vmatprep.subr.mxu0 0.0
        %397 = vmatpush1.msra.mxu0 %v361
        %398 = vmatprep.subr.mxu0 0.0
        %399 = vmatpush1.msra.mxu0 %v360
        %400 = vmatprep.subr.mxu0 0.0
        %401 = vmatpush1.msra.mxu0 %v359
        %402 = vmatprep.subr.mxu0 0.0
        %403 = vmatpush1.msra.mxu0 %v358
        %404 = vmatprep.subr.mxu0 0.0
        %405 = vmatpush1.msra.mxu0 %v357
        %406 = vmatprep.subr.mxu0 0.0
        %407 = vmatpush1.msra.mxu0 %v356
        %408 = vmatprep.subr.mxu0 0.0
        %409 = vmatpush1.msra.mxu0 %v355
        %410 = vmatprep.subr.mxu0 0.0
        %411 = vmatpush1.msra.mxu0 %v354
        %412 = vmatprep.subr.mxu0 0.0
        %413 = vmatpush1.msra.mxu0 %v353
        %414 = vmatprep.subr.mxu0 0.0
        %415 = vmatpush1.msra.mxu0 %v352
        %416 = vmatprep.subr.mxu0 0.0
        %417 = vmatpush2.msra.mxu0 0.0
        %418 = vmatprep.subr.mxu0 0.0
        %419 = vmatpush2.msra.mxu0 0.0
        %420 = vmatprep.subr.mxu0 0.0
        %421 = vmatpush2.msra.mxu0 0.0
        %422 = vmatprep.subr.mxu0 0.0
        %423 = vmatpush2.msra.mxu0 0.0
        %424 = vmatprep.subr.mxu0 0.0
        %425 = vmatpush2.msra.mxu0 0.0
        %426 = vmatprep.subr.mxu0 0.0
        %427 = vmatpush2.msra.mxu0 0.0
        %428 = vmatprep.subr.mxu0 0.0
        %429 = vmatpush2.msra.mxu0 0.0
        %430 = vmatprep.subr.mxu0 0.0
        %431 = vmatpush2.msra.mxu0 0.0
        %432 = vmatprep.subr.mxu0 0.0
        %433 = vmatpush2.msra.mxu0 0.0
        %434 = vmatprep.subr.mxu0 0.0
        %435 = vmatpush2.msra.mxu0 0.0
        %436 = vmatprep.subr.mxu0 0.0
        %437 = vmatpush2.msra.mxu0 0.0
        %438 = vmatprep.subr.mxu0 0.0
        %439 = vmatpush2.msra.mxu0 0.0
        %440 = vmatprep.subr.mxu0 0.0
        %441 = vmatpush2.msra.mxu0 0.0
        %442 = vmatprep.subr.mxu0 0.0
        %443 = vmatpush2.msra.mxu0 0.0
        %444 = vmatprep.subr.mxu0 0.0
        %445 = vmatpush2.msra.mxu0 0.0
        %446 = vmatprep.subr.mxu0 0.0
        %447 = vmatpush2.msra.mxu0 0.0
        %448 = vmatprep.mubr.f32.mxu0 0.0
        %449 = vmatmul.mubr.f32.gmra.mxu0 %v375
        %v450 = vpop.f32.mrf.mxu0
        %v451 = vadd.f32 0.0, %v450
        %v452 = vpop.f32.mrf.mxu0
        %453 = vdwg.mxu0
        %v454 = vstv %s381
        %v455 = vmul.f32 %v454, %v451
        %v456 = vadd.f32 %v383, %v455
        %457 = vst [vmem:[%s345] sm:$0xff] %v456
        %v458 = vld [vmem:[%s318] sm:$0xff]
        %v459 = vsub.f32 %v456, %v458
        %v460 = vmul.f32 %v459, %v459
        %v461 = vadd.f32 %v376, %v460
        %s462 = sadd.s32 %s377, 1
        %s463 = sld [smem:[#allocation9 + %s462]]
        %s464 = smul.f32 %s463, %s351
        %s465 = ssub.f32 1.0, %s464
        %s466 = smul.f32 %s463, %s350
        %v467 = vstv %s465
        %v468 = vmul.f32 %v467, %v456
        %469 = vmatprep.subr.mxu0 0.0
        %470 = vmatpush1.msra.mxu0 %v367
        %471 = vmatprep.subr.mxu0 0.0
        %472 = vmatpush1.msra.mxu0 %v366
        %473 = vmatprep.subr.mxu0 0.0
        %474 = vmatpush1.msra.mxu0 %v365
        %475 = vmatprep.subr.mxu0 0.0
        %476 = vmatpush1.msra.mxu0 %v364
        %477 = vmatprep.subr.mxu0 0.0
        %478 = vmatpush1.msra.mxu0 %v363
        %479 = vmatprep.subr.mxu0 0.0
        %480 = vmatpush1.msra.mxu0 %v362
        %481 = vmatprep.subr.mxu0 0.0
        %482 = vmatpush1.msra.mxu0 %v361
        %483 = vmatprep.subr.mxu0 0.0
        %484 = vmatpush1.msra.mxu0 %v360
        %485 = vmatprep.subr.mxu0 0.0
        %486 = vmatpush1.msra.mxu0 %v359
        %487 = vmatprep.subr.mxu0 0.0
        %488 = vmatpush1.msra.mxu0 %v358
        %489 = vmatprep.subr.mxu0 0.0
        %490 = vmatpush1.msra.mxu0 %v357
        %491 = vmatprep.subr.mxu0 0.0
        %492 = vmatpush1.msra.mxu0 %v356
        %493 = vmatprep.subr.mxu0 0.0
        %494 = vmatpush1.msra.mxu0 %v355
        %495 = vmatprep.subr.mxu0 0.0
        %496 = vmatpush1.msra.mxu0 %v354
        %497 = vmatprep.subr.mxu0 0.0
        %498 = vmatpush1.msra.mxu0 %v353
        %499 = vmatprep.subr.mxu0 0.0
        %500 = vmatpush1.msra.mxu0 %v352
        %501 = vmatprep.subr.mxu0 0.0
        %502 = vmatpush2.msra.mxu0 0.0
        %503 = vmatprep.subr.mxu0 0.0
        %504 = vmatpush2.msra.mxu0 0.0
        %505 = vmatprep.subr.mxu0 0.0
        %506 = vmatpush2.msra.mxu0 0.0
        %507 = vmatprep.subr.mxu0 0.0
        %508 = vmatpush2.msra.mxu0 0.0
        %509 = vmatprep.subr.mxu0 0.0
        %510 = vmatpush2.msra.mxu0 0.0
        %511 = vmatprep.subr.mxu0 0.0
        %512 = vmatpush2.msra.mxu0 0.0
        %513 = vmatprep.subr.mxu0 0.0
        %514 = vmatpush2.msra.mxu0 0.0
        %515 = vmatprep.subr.mxu0 0.0
        %516 = vmatpush2.msra.mxu0 0.0
        %517 = vmatprep.subr.mxu0 0.0
        %518 = vmatpush2.msra.mxu0 0.0
        %519 = vmatprep.subr.mxu0 0.0
        %520 = vmatpush2.msra.mxu0 0.0
        %521 = vmatprep.subr.mxu0 0.0
        %522 = vmatpush2.msra.mxu0 0.0
        %523 = vmatprep.subr.mxu0 0.0
        %524 = vmatpush2.msra.mxu0 0.0
        %525 = vmatprep.subr.mxu0 0.0
        %526 = vmatpush2.msra.mxu0 0.0
        %527 = vmatprep.subr.mxu0 0.0
        %528 = vmatpush2.msra.mxu0 0.0
        %529 = vmatprep.subr.mxu0 0.0
        %530 = vmatpush2.msra.mxu0 0.0
        %531 = vmatprep.subr.mxu0 0.0
        %532 = vmatpush2.msra.mxu0 0.0
        %533 = vmatprep.mubr.f32.mxu0 0.0
        %534 = vmatmul.mubr.f32.gmra.mxu0 %v456
        %v535 = vpop.f32.mrf.mxu0
        %v536 = vadd.f32 0.0, %v535
        %v537 = vpop.f32.mrf.mxu0
        %538 = vdwg.mxu0
        %v539 = vstv %s466
        %v540 = vmul.f32 %v539, %v536
        %v541 = vadd.f32 %v468, %v540
        %s542 = scalar_lea.vmem %s345, 8 [#allocation14]
        %543 = vst [vmem:[%s542] sm:$0xff] %v541
        %s544 = scalar_lea.vmem %s318, 8 [#allocation13]
        %v545 = vld [vmem:[%s544] sm:$0xff]
        %v546 = vsub.f32 %v541, %v545
        %v547 = vmul.f32 %v546, %v546
        %v548 = vadd.f32 %v461, %v547
        %549 = vst [vmem:[#allocation2] sm:$0xff] %v541
        %550 = vst [vmem:[#allocation3] sm:$0xff] %v548
        %p551 = scmp.eq.s32.totalorder %s31, 3
        // Predicated region
        $region65: #{tpu_custom_call.1} parent=39 // pred_check
          %p552 = pneg %p551
        $region66: #{tpu_custom_call.1} parent=39 // pred_check_branch
          %554 = sbr.rel (%p552) target = $region68
        $region67: #{tpu_custom_call.1} parent=39 // pred_region
          %555 = vadd.xlane.f32.xlu0 %v548
          %v556 = vpop.xlane.xlu0 %555
          %v557 = vrot.slane %v556, 4
          %v558 = vadd.f32 %v556, %v557
          %v559 = vrot.slane %v558, 2
          %v560 = vadd.f32 %v558, %v559
          %v561 = vrot.slane %v560, 1
          %v562 = vadd.f32 %v560, %v561
          %s563 = vtos %v562
          %v564 = vstv %s563
          %v565 = vadd.f32 %v564, 0.0
          %566 = vst [vmem:[#allocation15] sm:$0xff] %v565
        $region68: #{tpu_custom_call.1} parent=39 // pred_fallthru
          _
        %s567 = sand.u32 %s165, 1
        %s568 = scalar_lea.sflag [#allocation6], %s567
        %s569 = sand.u32 %s165, 1
        %s570 = smul.addr %s569, 16
        %s571 = scalar_lea.vmem [#allocation14], %s570
        // Predicated region
        $region69: #{tpu_custom_call.1} parent=39 // pred_check
          %p572 = pneg %p175
        $region70: #{tpu_custom_call.1} parent=39 // pred_check_branch
          %574 = sbr.rel (%p572) target = $region72
        $region71: #{tpu_custom_call.1} parent=39 // pred_region
          %s575 = smul.u32 2, %s31
          %s577 = ssub.s32 256, 256
          %578 = vsyncadd %s568, %s577
          %s579 = sadd.s32 %s30, %s575
          %s580 = smul.addr %s579, 128
          %s581 = scalar_lea.hbm %s5, %s580
          %s582 = sshll.u32 %s571, 4
          %s583 = int_to_ptr.vmem [resolvable:$true] %s582
          %588 = dma.vmem_to_hbm [thread:$0]  %s583, 256, %s581, %s568, 128, 128, 8
        $region72: #{tpu_custom_call.1} parent=39 // pred_fallthru
          _
        // Predicated region
        $region73: #{tpu_custom_call.1} parent=39 // pred_check
          %p589 = pneg %p201
        $region74: #{tpu_custom_call.1} parent=39 // pred_check_branch
          %591 = sbr.rel (%p589) target = $region76
        $region75: #{tpu_custom_call.1} parent=39 // pred_region
          %s593 = ssub.s32 128, 128
          %594 = vsyncadd [#allocation16], %s593
          %s595 = smul.addr %s30, 128
          %s596 = scalar_lea.hbm %s6, %s595
          %s598 = sshll.u32 [#allocation15], 4
          %s599 = int_to_ptr.vmem [resolvable:$true] %s598
          %601 = dma.vmem_to_hbm [thread:$0]  %s599, 128, %s596, [#allocation16]
        $region76: #{tpu_custom_call.1} parent=39 // pred_fallthru
          _
        // Predicated region
        $region77: #{tpu_custom_call.1} parent=39 // pred_check
          %p602 = pneg %p201
        $region78: #{tpu_custom_call.1} parent=39 // pred_check_branch
          %604 = sbr.rel (%p602) target = $region80
        $region79: #{tpu_custom_call.1} parent=39 // pred_region
          %605 = dma.done [#allocation16], 128
        $region80: #{tpu_custom_call.1} parent=39 // pred_fallthru
          _
      $region40: #{tpu_custom_call.1} parent=5 // pred_fallthru
        _
      %p606 = scmp.le.s32.totalorder 2, %s21
      // Predicated region
      $region81: #{tpu_custom_call.1} parent=5 // pred_check
        %p607 = pneg %p606
      $region82: #{tpu_custom_call.1} parent=5 // pred_check_branch
        %609 = sbr.rel (%p607) target = $region84
      $region83: #{tpu_custom_call.1} parent=5 // pred_region
        %s610 = ssub.s32 %s21, 2
        // Predicated region
        $region85: #{tpu_custom_call.1} parent=83 // pred_check
          %p611 = pneg %p181
        $region86: #{tpu_custom_call.1} parent=83 // pred_check_branch
          %613 = sbr.rel (%p611) target = $region88
        $region87: #{tpu_custom_call.1} parent=83 // pred_region
          %s614 = sand.u32 %s166, 1
          %s615 = scalar_lea.sflag [#allocation6], %s614
          %s616 = sand.u32 %s166, 1
          %s617 = smul.addr %s616, 16
          %s618 = scalar_lea.vmem [#allocation14], %s617
          %619 = dma.done %s615, 256
        $region88: #{tpu_custom_call.1} parent=83 // pred_fallthru
          _
      $region84: #{tpu_custom_call.1} parent=5 // pred_fallthru
        _
    $region6: #{tpu_custom_call.1} parent=1 // loop_footer
      %s25 = sadd.s32 1, %s21
    $region7: #{tpu_custom_call.1} parent=1 // loop_footer_branch
      %20 = sbr.rel target = $region3
    $region8: #{tpu_custom_call.1} parent=1 // loop_exit
      _
    %620 = vsyncpa [#allocation5], 1
    %s621 = scalar_lea.sflag [#allocation5], 1
    %622 = vsyncpa %s621, 1
    %623 = vsyncpa [#allocation12], 1
    %624 = vsyncpa [#allocation6], 1
    %s625 = scalar_lea.sflag [#allocation6], 1
    %626 = vsyncpa %s625, 1
    %627 = vsyncpa [#allocation16], 1
    %628 = vsyncpa [#allocation7], 1
    %s629 = scalar_lea.sflag [#allocation7], 1
    %630 = vsyncpa %s629, 1
    %631 = vsyncpa [#allocation8], 1
    %s632 = scalar_lea.sflag [#allocation8], 1
    %633 = vsyncpa %s632, 1

</llo_original>
